<compile_context>
chip_gen: v7x
topology: tpu7x:2x2x1
jax: 0.10.0
libtpu: 0.0.40
codegen_flags: <defaults>
</compile_context>

<pallas_src>
import functools

import jax
import jax.numpy as jnp
from jax.experimental import pallas as pl
from jax.experimental.pallas import tpu as pltpu


def linear_kernel(x_ref, w_ref, b_ref, o_ref):
    # y = x @ W + b  (W already pre-transposed to (in_f, out_f) at init time).
    x = x_ref[...]                      # (B, in_f)
    w = w_ref[...]                      # (in_f, out_f)
    b = b_ref[...]                      # (1, out_f)
    acc = jnp.dot(x, w, preferred_element_type=jnp.float32)   # MXU, f32 acc
    o_ref[...] = (acc + b).astype(o_ref.dtype)                # VPU bias add


def init_small_model_params(weight, bias):
    """One-time parameter preparation (OUTSIDE the per-call hot path).

    weight: (out_f, in_f)  -- PyTorch nn.Linear layout.
    bias:   (out_f,)
    Returns params dict with weight pre-transposed to (in_f, out_f) and bias
    reshaped to (1, out_f), materialized once.
    """
    out_f, in_f = weight.shape
    w_t = jnp.asarray(weight, dtype=jnp.float32).T          # (in_f, out_f)
    b2d = jnp.asarray(bias, dtype=jnp.float32).reshape(1, out_f)
    return {"w_t": jax.block_until_ready(w_t),
            "b2d": jax.block_until_ready(b2d)}


@functools.partial(jax.jit, static_argnames=())
def small_model_forward(params, x):
    """x: (B, in_f) float32. Returns (B, out_f)."""
    w_t = params["w_t"]                 # (in_f, out_f), prepared at init
    b2d = params["b2d"]                 # (1, out_f), prepared at init
    B, in_f = x.shape
    in_f_w, out_f = w_t.shape
    assert in_f == in_f_w

    itemsize = jnp.dtype(x.dtype).itemsize
    cost = pl.CostEstimate(
        flops=2 * B * in_f * out_f,
        transcendentals=0,
        bytes_accessed=(x.size + w_t.size + b2d.size + B * out_f) * itemsize,
    )

    vmem = pl.BlockSpec(memory_space=pltpu.MemorySpace.VMEM)
    return pl.pallas_call(
        linear_kernel,
        out_shape=jax.ShapeDtypeStruct((B, out_f), x.dtype),
        in_specs=[vmem, vmem, vmem],     # whole arrays as single VMEM blocks, no grid
        out_specs=vmem,
        cost_estimate=cost,
    )(x, w_t, b2d)


if __name__ == "__main__":
    input_size = 10
    output_size = 5
    batch = 8

    key = jax.random.PRNGKey(0)
    kx, kw, kb = jax.random.split(key, 3)

    # Deterministic parameter init mimicking torch.nn.Linear default
    # (uniform in [-1/sqrt(fan_in), 1/sqrt(fan_in)]).
    bound = 1.0 / (input_size ** 0.5)
    weight = jax.random.uniform(kw, (output_size, input_size),
                                dtype=jnp.float32, minval=-bound, maxval=bound)
    bias = jax.random.uniform(kb, (output_size,),
                              dtype=jnp.float32, minval=-bound, maxval=bound)

    x = jax.random.normal(kx, (batch, input_size), dtype=jnp.float32)

    # One-time layout prep (transpose + reshape) happens here, not per call.
    params = init_small_model_params(weight, bias)

    out = small_model_forward(params, x)
    out = jax.block_until_ready(out)

    # Correctness check against plain-JAX reference (y = x @ W^T + b).
    ref = x @ weight.T + bias
    assert out.shape == (batch, output_size)
    assert jnp.allclose(out, ref, atol=1e-5, rtol=1e-5)

    print("KERNEL_OK")
</pallas_src>

<mosaic_0001>
module attributes {stable_mosaic.version = 11 : i64} {
  func.func @linear_kernel(%arg0: memref<8x10xf32, #tpu.memory_space<vmem>>, %arg1: memref<10x5xf32, #tpu.memory_space<vmem>>, %arg2: memref<1x5xf32, #tpu.memory_space<vmem>>, %arg3: memref<8x5xf32, #tpu.memory_space<vmem>>) attributes {dimension_semantics = [], scalar_prefetch = 0 : i64, scratch_operands = 0 : i64, tpu.core_type = #tpu.core_type<tc>} {
    %c0 = arith.constant 0 : index
    %c0_0 = arith.constant 0 : index
    %0 = vector.load %arg0[%c0, %c0_0] : memref<8x10xf32, #tpu.memory_space<vmem>>, vector<8x10xf32>
    %c0_1 = arith.constant 0 : index
    %c0_2 = arith.constant 0 : index
    %1 = vector.load %arg1[%c0_1, %c0_2] : memref<10x5xf32, #tpu.memory_space<vmem>>, vector<10x5xf32>
    %c0_3 = arith.constant 0 : index
    %c0_4 = arith.constant 0 : index
    %2 = vector.load %arg2[%c0_3, %c0_4] : memref<1x5xf32, #tpu.memory_space<vmem>>, vector<1x5xf32>
    %cst = arith.constant dense<0.000000e+00> : vector<8x5xf32>
    %3 = tpu.matmul %0, %1, %cst {dimension_numbers = #tpu.dot_dimension_numbers<[1], [0], [0], [1], [0, 0, 1, 1], [], []>} : vector<8x10xf32>, vector<10x5xf32>, vector<8x5xf32> -> vector<8x5xf32>
    %4 = vector.broadcast %2 : vector<1x5xf32> to vector<8x5xf32>
    %5 = arith.addf %3, %4 : vector<8x5xf32>
    %c0_5 = arith.constant 0 : index
    %c0_6 = arith.constant 0 : index
    %6 = vector.load %arg3[%c0_5, %c0_6] : memref<8x5xf32, #tpu.memory_space<vmem>>, vector<8x5xf32>
    tpu.vector_store %arg3[%c0_5, %c0_6], %5 {strides = array<i32>} : memref<8x5xf32, #tpu.memory_space<vmem>>, vector<8x5xf32>,
    return
  }
}

</mosaic_0001>

<llo_original>
// kernel: small_model_forward.1
$region0: #{small_model_forward.1}
  #allocation0 [shape = 'u32[]', space=smem, size = 0x4, offset = 0x4, fixed_abs, tag = 'smem constant byte address 0x4 - core index']
  #allocation1 [shape = 'u32[144,128]{1,0:T(1,128)}', space=vmem, size = 0x12000, scoped, tag = 'internal scratch']
  %s0 = inlined_call_operand.vmem [shape: f32[8,10], index: 0, kind: input, shape index: {}]
  %s1 = inlined_call_operand.vmem [shape: f32[10,5], index: 1, kind: input, shape index: {}]
  %s2 = inlined_call_operand.vmem [shape: f32[1,5], index: 2, kind: input, shape index: {}]
  %s3 = inlined_call_operand.hbm [shape: f32[8,5], index: 3, kind: output, shape index: {}]
  %s4 = sld [smem:[#allocation0]]
  $region22: #{small_model_forward.1} parent=0
    _
  %s6 = ssub.s32 1, %s4
  %s7 = scalar_select 0, %s6, %s4
  $region1: #{small_model_forward.1} parent=0
    #allocation2 [shape = 'u8[4096]{0}', space=vmem, size = 0x1000, scoped, tag = 'output window, operand 0, single buffered']
    #allocation3 [shape = 's32[1]{0}', space=sflag, size = 0x4, scoped, tag = 'scoped memory for small_model_forward.1']
    %8 = vsyncpa [#allocation3], 0
    // Predicated region
    $region2: #{small_model_forward.1} parent=1 // pred_check
      _
    $region3: #{small_model_forward.1} parent=1 // pred_check_branch
      %10 = sbr.rel (0) target = $region5
    $region4: #{small_model_forward.1} parent=1 // pred_region
      _
    $region5: #{small_model_forward.1} parent=1 // pred_fallthru
      _
    // Predicated region
    $region6: #{small_model_forward.1} parent=1 // pred_check
      _
    $region7: #{small_model_forward.1} parent=1 // pred_check_branch
      %12 = sbr.rel (0) target = $region9
    $region8: #{small_model_forward.1} parent=1 // pred_region
      _
    $region9: #{small_model_forward.1} parent=1 // pred_fallthru
      _
    // Predicated region
    $region10: #{small_model_forward.1} parent=1 // pred_check
      _
    $region11: #{small_model_forward.1} parent=1 // pred_check_branch
      %14 = sbr.rel (0) target = $region13
    $region12: #{small_model_forward.1} parent=1 // pred_region
      _
    $region13: #{small_model_forward.1} parent=1 // pred_fallthru
      _
    %v15 = vld [vmem:[%s0] sm:$0xff]
    %v16 = vld [vmem:[%s1] sm:$0xff]
    %v17 = vld [vmem:[%s1 + $0x8] sm:$0x3]
    %v18 = vld [vmem:[%s2] sm:$0x1]
    %v20 = vlaneseq
    %v21 = vshrl.u32 %v20, 7
    %v22 = vsub.s32 0, %v21
    %v23 = vrot.slane %v18, %v22
    %vm25 = vcmask 80896
    %v27 = vsel %vm25, %v15, 0
    %vm29 = vcmask 1041408
    %v31 = vsel %vm29, %v17, 0
    %33 = vmatprep.subr.mxu0 0.0
    %34 = vmatpush1.msra.mxu0 %v16
    %35 = vmatprep.subr.mxu0 0.0
    %36 = vmatpush1.msra.mxu0 %v31
    %37 = vmatprep.subr.mxu0 0.0
    %38 = vmatpush1.msra.mxu0 0.0
    %39 = vmatprep.subr.mxu0 0.0
    %40 = vmatpush1.msra.mxu0 0.0
    %41 = vmatprep.subr.mxu0 0.0
    %42 = vmatpush1.msra.mxu0 0.0
    %43 = vmatprep.subr.mxu0 0.0
    %44 = vmatpush1.msra.mxu0 0.0
    %45 = vmatprep.subr.mxu0 0.0
    %46 = vmatpush1.msra.mxu0 0.0
    %47 = vmatprep.subr.mxu0 0.0
    %48 = vmatpush1.msra.mxu0 0.0
    %49 = vmatprep.subr.mxu0 0.0
    %50 = vmatpush1.msra.mxu0 0.0
    %51 = vmatprep.subr.mxu0 0.0
    %52 = vmatpush1.msra.mxu0 0.0
    %53 = vmatprep.subr.mxu0 0.0
    %54 = vmatpush1.msra.mxu0 0.0
    %55 = vmatprep.subr.mxu0 0.0
    %56 = vmatpush1.msra.mxu0 0.0
    %57 = vmatprep.subr.mxu0 0.0
    %58 = vmatpush1.msra.mxu0 0.0
    %59 = vmatprep.subr.mxu0 0.0
    %60 = vmatpush1.msra.mxu0 0.0
    %61 = vmatprep.subr.mxu0 0.0
    %62 = vmatpush1.msra.mxu0 0.0
    %63 = vmatprep.subr.mxu0 0.0
    %64 = vmatpush1.msra.mxu0 0.0
    %65 = vmatprep.subr.mxu0 0.0
    %66 = vmatpush1.msra.mxu0 0.0
    %67 = vmatprep.subr.mxu0 0.0
    %68 = vmatpush1.msra.mxu0 0.0
    %69 = vmatprep.subr.mxu0 0.0
    %70 = vmatpush1.msra.mxu0 0.0
    %71 = vmatprep.subr.mxu0 0.0
    %72 = vmatpush1.msra.mxu0 0.0
    %73 = vmatprep.subr.mxu0 0.0
    %74 = vmatpush1.msra.mxu0 0.0
    %75 = vmatprep.subr.mxu0 0.0
    %76 = vmatpush1.msra.mxu0 0.0
    %77 = vmatprep.subr.mxu0 0.0
    %78 = vmatpush1.msra.mxu0 0.0
    %79 = vmatprep.subr.mxu0 0.0
    %80 = vmatpush1.msra.mxu0 0.0
    %81 = vmatprep.subr.mxu0 0.0
    %82 = vmatpush1.msra.mxu0 0.0
    %83 = vmatprep.subr.mxu0 0.0
    %84 = vmatpush1.msra.mxu0 0.0
    %85 = vmatprep.subr.mxu0 0.0
    %86 = vmatpush1.msra.mxu0 0.0
    %87 = vmatprep.subr.mxu0 0.0
    %88 = vmatpush1.msra.mxu0 0.0
    %89 = vmatprep.subr.mxu0 0.0
    %90 = vmatpush1.msra.mxu0 0.0
    %91 = vmatprep.subr.mxu0 0.0
    %92 = vmatpush1.msra.mxu0 0.0
    %93 = vmatprep.subr.mxu0 0.0
    %94 = vmatpush1.msra.mxu0 0.0
    %95 = vmatprep.subr.mxu0 0.0
    %96 = vmatpush1.msra.mxu0 0.0
    %97 = vmatprep.mubr.f32.mxu0 0.0
    %98 = vmatmul.mubr.f32.gmra.mrb[0].mxu0 %v27
    %v99 = vpop.f32.mrb[0].mxu0
    %v100 = vadd.f32 %v23, %v99
    %v101 = vpop.f32.mrb[0].mxu0
    %102 = vdwg.mxu0
    %vm103 = vcmask 39936
    %104 = vst.msk [vmem:[#allocation2] sm:$0xff] %vm103, %v100
    // Predicated region
    $region14: #{small_model_forward.1} parent=1 // pred_check
      _
    $region15: #{small_model_forward.1} parent=1 // pred_check_branch
      %106 = sbr.rel (0) target = $region17
    $region16: #{small_model_forward.1} parent=1 // pred_region
      %s108 = ssub.s32 128, 128
      %109 = vsyncadd [#allocation3], %s108
      %s111 = sshll.u32 [#allocation2], 4
      %s112 = int_to_ptr.vmem [resolvable:$true] %s111
      %114 = dma.vmem_to_hbm [thread:$0]  %s112, 128, %s3, [#allocation3]
    $region17: #{small_model_forward.1} parent=1 // pred_fallthru
      _
    // Predicated region
    $region18: #{small_model_forward.1} parent=1 // pred_check
      _
    $region19: #{small_model_forward.1} parent=1 // pred_check_branch
      %116 = sbr.rel (0) target = $region21
    $region20: #{small_model_forward.1} parent=1 // pred_region
      %117 = dma.done [#allocation3], 128
    $region21: #{small_model_forward.1} parent=1 // pred_fallthru
      _
    %118 = vsyncpa [#allocation3], 1

</llo_original>
